<compile_context>
chip_gen: v7x
topology: tpu7x:2x2x1
jax: 0.10.0
libtpu: 0.0.40
codegen_flags: <defaults>
</compile_context>

<pallas_src>
import functools

import jax
import jax.numpy as jnp
from jax.experimental import pallas as pl
from jax.experimental.pallas import tpu as pltpu


_NO_DIV_BY_ZERO = 1e-9
_MAX_BLOCK_BYTES = 4 << 20   # ~4 MiB per x/out block (sweet spot across chips)
_PREF_T_TILE = 4096          # preferred lane tile before budget-driven widening


def _snake_beta_kernel(x_ref, alpha_ref, inv_beta_ref, o_ref):
    # x_ref / o_ref block: (rows_tile, t_tile); params: (rows_tile, 1) f32.
    xf = x_ref[...].astype(jnp.float32)          # f32 compute path (v5e-safe)
    s = jnp.sin(xf * alpha_ref[...])             # (rows,1) broadcasts over lanes
    # TODO(synk): if v7x profiling shows VALU-bound, consider a bf16 /
    # reduced-precision sin path (v6e/v7x only).
    o_ref[...] = (xf + inv_beta_ref[...] * (s * s)).astype(o_ref.dtype)


def _sublane_pack(itemsize):
    return {4: 8, 2: 16, 1: 32}.get(itemsize, 8)


def _choose_tiles(rows, T, itemsize):
    """Pick (rows_tile, t_tile): sublane/lane dense, bounded by the byte budget."""
    sub = _sublane_pack(itemsize)
    rows_p = pl.cdiv(rows, sub) * sub            # sublane-padded row count

    if T <= 128:
        # Full-extent lane block (masked stores if T < 128; fine for tiny T).
        t_tile = T
    else:
        t_full = pl.cdiv(T, 128) * 128
        t_tile = min(t_full, _PREF_T_TILE)
        rows_fit = _MAX_BLOCK_BYTES // (t_tile * itemsize)
        if rows_p <= rows_fit:
            # All rows fit at the preferred lane tile: spend leftover budget on
            # a wider lane tile (amortizes the ~0.35us per-grid-step overhead).
            t_budget = (_MAX_BLOCK_BYTES // (rows_p * itemsize)) // 128 * 128
            t_tile = min(t_full, max(t_tile, t_budget))

    rows_budget = max(_MAX_BLOCK_BYTES // (max(t_tile, 1) * itemsize), sub)
    if rows <= rows_budget:
        rows_tile = rows                          # full extent along rows
    else:
        rows_tile = max((rows_budget // sub) * sub, sub)
    return rows_tile, t_tile


@functools.partial(jax.jit, static_argnames=("alpha_logscale",))
def snake_beta(x, alpha, bias, *, alpha_logscale=False):
    """x: (B, C, T); alpha, bias: (C,). Returns array with x's shape/dtype."""
    B, C, T = x.shape
    rows = B * C

    # Tiny (C,) parameter prep in f32, pre-broadcast to (B*C, 1) (glue outside
    # the kernel; a few KiB at most).
    alpha_f32 = alpha.astype(jnp.float32)
    beta_f32 = bias.astype(jnp.float32)
    if alpha_logscale:
        alpha_f32 = jnp.exp(alpha_f32)
        beta_f32 = jnp.exp(beta_f32)
    inv_beta_f32 = 1.0 / (beta_f32 + _NO_DIV_BY_ZERO)

    alpha2d = jnp.broadcast_to(alpha_f32[None, :], (B, C)).reshape(rows, 1)
    inv_beta2d = jnp.broadcast_to(inv_beta_f32[None, :], (B, C)).reshape(rows, 1)

    # Free reshape (contiguous): (B, C, T) -> (B*C, T).
    x2d = x.reshape(rows, T)

    rows_tile, t_tile = _choose_tiles(rows, T, x.dtype.itemsize)
    n_r = pl.cdiv(rows, rows_tile)
    n_t = pl.cdiv(T, t_tile)

    # Double-buffered x + out blocks, plus params and a little headroom.
    block_bytes = rows_tile * t_tile * x.dtype.itemsize
    vmem_limit = int(min(40 << 20, max(16 << 20, 4 * block_bytes + (2 << 20))))

    out2d = pl.pallas_call(
        _snake_beta_kernel,
        out_shape=jax.ShapeDtypeStruct((rows, T), x.dtype),
        grid_spec=pltpu.PrefetchScalarGridSpec(
            num_scalar_prefetch=0,
            grid=(n_r, n_t),
            in_specs=[
                pl.BlockSpec((rows_tile, t_tile), lambda r, t: (r, t)),
                pl.BlockSpec((rows_tile, 1), lambda r, t: (r, 0)),
                pl.BlockSpec((rows_tile, 1), lambda r, t: (r, 0)),
            ],
            out_specs=pl.BlockSpec((rows_tile, t_tile), lambda r, t: (r, t)),
        ),
        compiler_params=pltpu.CompilerParams(
            dimension_semantics=("parallel", "parallel"),
            vmem_limit_bytes=vmem_limit,
        ),
    )(x2d, alpha2d, inv_beta2d)

    return out2d.reshape(B, C, T)


def snake_beta_ref(x, alpha, bias, *, alpha_logscale=False):
    """Pure-JAX reference for correctness check."""
    a = alpha.astype(jnp.float32)
    b = bias.astype(jnp.float32)
    if alpha_logscale:
        a = jnp.exp(a)
        b = jnp.exp(b)
    a = a[None, :, None]
    b = b[None, :, None]
    xf = x.astype(jnp.float32)
    y = xf + 1.0 / (b + _NO_DIV_BY_ZERO) * jnp.sin(xf * a) ** 2
    return y.astype(x.dtype)


def _check(key, B, C, T, *, alpha_logscale):
    kx, ka, kb = jax.random.split(key, 3)
    x = jax.random.normal(kx, (B, C, T), dtype=jnp.float32)
    # Deterministic params, perturbed so broadcasting is actually exercised.
    alpha = jnp.ones((C,), dtype=jnp.float32) + 0.1 * jax.random.normal(ka, (C,))
    bias = jnp.ones((C,), dtype=jnp.float32) + 0.1 * jax.random.normal(kb, (C,))

    out = snake_beta(x, alpha, bias, alpha_logscale=alpha_logscale)
    out = jax.block_until_ready(out)
    ref = snake_beta_ref(x, alpha, bias, alpha_logscale=alpha_logscale)

    assert out.shape == (B, C, T)
    assert out.dtype == x.dtype
    assert jnp.allclose(out, ref, atol=1e-5, rtol=1e-5), (
        f"mismatch vs reference for shape {(B, C, T)}")


if __name__ == "__main__":
    key = jax.random.PRNGKey(0)
    k0, k1, k2, k3 = jax.random.split(key, 4)

    # Small canonical shape (full-extent blocks on both axes).
    _check(k0, 2, 4, 16, alpha_logscale=False)
    # Ragged T (partial lane edge block, no padding round-trip).
    _check(k1, 1, 8, 300, alpha_logscale=False)
    # Log-scale params.
    _check(k2, 2, 8, 256, alpha_logscale=True)
    # Unaligned C (rows not a multiple of the sublane pack) + ragged T.
    _check(k3, 3, 5, 200, alpha_logscale=False)

    print("KERNEL_OK")
</pallas_src>

<mosaic_0001>
module attributes {stable_mosaic.version = 11 : i64} {
  func.func @_snake_beta_kernel(%arg0: i32, %arg1: i32, %arg2: memref<8x16xf32, #tpu.memory_space<vmem>>, %arg3: memref<8x1xf32, #tpu.memory_space<vmem>>, %arg4: memref<8x1xf32, #tpu.memory_space<vmem>>, %arg5: memref<8x16xf32, #tpu.memory_space<vmem>>) attributes {dimension_semantics = [#tpu.dimension_semantics<parallel>, #tpu.dimension_semantics<parallel>], iteration_bounds = array<i64: 1, 1>, scalar_prefetch = 0 : i64, scratch_operands = 0 : i64, tpu.core_type = #tpu.core_type<tc>, window_params = [{transform_indices = @transform_0, window_bounds = array<i64: 8, 16>}, {transform_indices = @transform_1, window_bounds = array<i64: 8, 1>}, {transform_indices = @transform_2, window_bounds = array<i64: 8, 1>}, {transform_indices = @transform_3, window_bounds = array<i64: 8, 16>}]} {
    %c0 = arith.constant 0 : index
    %c0_0 = arith.constant 0 : index
    %0 = vector.load %arg2[%c0, %c0_0] : memref<8x16xf32, #tpu.memory_space<vmem>>, vector<8x16xf32>
    %c0_1 = arith.constant 0 : index
    %c0_2 = arith.constant 0 : index
    %1 = vector.load %arg3[%c0_1, %c0_2] : memref<8x1xf32, #tpu.memory_space<vmem>>, vector<8x1xf32>
    %2 = vector.broadcast %1 : vector<8x1xf32> to vector<8x16xf32>
    %3 = arith.mulf %0, %2 : vector<8x16xf32>
    %4 = math.sin %3 : vector<8x16xf32>
    %c0_3 = arith.constant 0 : index
    %c0_4 = arith.constant 0 : index
    %5 = vector.load %arg4[%c0_3, %c0_4] : memref<8x1xf32, #tpu.memory_space<vmem>>, vector<8x1xf32>
    %6 = arith.mulf %4, %4 : vector<8x16xf32>
    %7 = vector.broadcast %5 : vector<8x1xf32> to vector<8x16xf32>
    %8 = arith.mulf %7, %6 : vector<8x16xf32>
    %9 = arith.addf %0, %8 : vector<8x16xf32>
    %c0_5 = arith.constant 0 : index
    %c0_6 = arith.constant 0 : index
    %10 = vector.load %arg5[%c0_5, %c0_6] : memref<8x16xf32, #tpu.memory_space<vmem>>, vector<8x16xf32>
    tpu.vector_store %arg5[%c0_5, %c0_6], %9 {strides = array<i32>} : memref<8x16xf32, #tpu.memory_space<vmem>>, vector<8x16xf32>,
    return
  }
  func.func @transform_0(%arg0: i32, %arg1: i32) -> (i32, i32) {
    %c0_i32 = arith.constant 0 : i32
    return %arg0, %arg1 : i32, i32
  }
  func.func @transform_1(%arg0: i32, %arg1: i32) -> (i32, i32) {
    %c0_i32 = arith.constant 0 : i32
    %c0_i32_0 = arith.constant 0 : i32
    return %arg0, %c0_i32 : i32, i32
  }
  func.func @transform_2(%arg0: i32, %arg1: i32) -> (i32, i32) {
    %c0_i32 = arith.constant 0 : i32
    %c0_i32_0 = arith.constant 0 : i32
    return %arg0, %c0_i32 : i32, i32
  }
  func.func @transform_3(%arg0: i32, %arg1: i32) -> (i32, i32) {
    %c0_i32 = arith.constant 0 : i32
    return %arg0, %arg1 : i32, i32
  }
}

</mosaic_0001>

<llo_original>
// kernel: snake_beta.1
$region0: #{snake_beta.1}
  #allocation0 [shape = 'u32[]', space=smem, size = 0x4, offset = 0x4, fixed_abs, tag = 'smem constant byte address 0x4 - core index']
  #allocation1 [shape = 'u32[144,128]{1,0:T(1,128)}', space=vmem, size = 0x12000, scoped, tag = 'internal scratch']
  %s0 = inlined_call_operand.vmem [shape: f32[8,16], index: 0, kind: input, shape index: {}]
  %s1 = inlined_call_operand.vmem [shape: f32[8,1], index: 1, kind: input, shape index: {}]
  %s2 = inlined_call_operand.vmem [shape: f32[8,1], index: 2, kind: input, shape index: {}]
  %s3 = inlined_call_operand.hbm [shape: f32[8,16], index: 3, kind: output, shape index: {}]
  %s4 = sld [smem:[#allocation0]]
  $region22: #{snake_beta.1} parent=0
    _
  %s6 = ssub.s32 1, %s4
  %s7 = scalar_select 0, %s6, %s4
  $region1: #{snake_beta.1} parent=0
    #allocation2 [shape = 'u8[4096]{0}', space=vmem, size = 0x1000, scoped, tag = 'output window, operand 0, single buffered']
    #allocation3 [shape = 's32[1]{0}', space=sflag, size = 0x4, scoped, tag = 'scoped memory for snake_beta.1']
    %8 = vsyncpa [#allocation3], 0
    // Predicated region
    $region2: #{snake_beta.1} parent=1 // pred_check
      _
    $region3: #{snake_beta.1} parent=1 // pred_check_branch
      %10 = sbr.rel (0) target = $region5
    $region4: #{snake_beta.1} parent=1 // pred_region
      _
    $region5: #{snake_beta.1} parent=1 // pred_fallthru
      _
    // Predicated region
    $region6: #{snake_beta.1} parent=1 // pred_check
      _
    $region7: #{snake_beta.1} parent=1 // pred_check_branch
      %12 = sbr.rel (0) target = $region9
    $region8: #{snake_beta.1} parent=1 // pred_region
      _
    $region9: #{snake_beta.1} parent=1 // pred_fallthru
      _
    // Predicated region
    $region10: #{snake_beta.1} parent=1 // pred_check
      _
    $region11: #{snake_beta.1} parent=1 // pred_check_branch
      %14 = sbr.rel (0) target = $region13
    $region12: #{snake_beta.1} parent=1 // pred_region
      _
    $region13: #{snake_beta.1} parent=1 // pred_fallthru
      _
    %v15 = vld [vmem:[%s0] sm:$0xff]
    %v16 = vld [vmem:[%s1] sm:$0xff]
    %18 = vset.pattern.permute.xlu0 0
    %19 = vperm.xlu0 %18, %v16
    %v20 = vpop.permute.xlu0 %19
    %v22 = vmul.f32 %v15, %v20
    %v23 = vand.u32 2147483647, %v22
    %vm24 = vcmp.le.f32.partialorder %v23, 0.7853982
    %vm25 = vcmp.lt.s32.totalorder %v22, 0
    %v26 = vand.u32 %v22, 2139095040
    %v27 = vshrl.u32 %v26, 23
    %v28 = vsub.s32 %v27, 127
    %v29 = vand.u32 2147483647, %v22
    %v30 = vand.u32 %v29, 8388607
    %v31 = vor.u32 %v30, 8388608
    %v32 = vsub.s32 0, %v31
    %v33 = vadd.s32 %v28, 1
    %vm34 = vcmp.gt.s32.totalorder %v33, 0
    %v35 = vsel %vm34, %v33, 0
    %v36 = vshrl.u32 %v35, 5
    %v37 = vand.u32 %v35, 31
    %v38 = vsub.s32 32, %v37
    %v39 = vshrl.u32 683565275, %v38
    %v40 = vshll.u32 683565275, %v37
    %v41 = vshrl.u32 2475754826, %v38
    %v42 = vor.u32 %v40, %v41
    %v43 = vshll.u32 2475754826, %v37
    %v44 = vshrl.u32 2131351028, %v38
    %v45 = vor.u32 %v43, %v44
    %v46 = vshll.u32 2131351028, %v37
    %v47 = vshrl.u32 2102212464, %v38
    %v48 = vor.u32 %v46, %v47
    %v49 = vshll.u32 2102212464, %v37
    %v50 = vshrl.u32 920167782, %v38
    %v51 = vor.u32 %v49, %v50
    %v52 = vshll.u32 920167782, %v37
    %v53 = vshrl.u32 1326507024, %v38
    %v54 = vor.u32 %v52, %v53
    %vm55 = vcmp.lt.s32.totalorder %v36, 1
    %vm56 = vcmp.lt.s32.totalorder %v36, 2
    %vm57 = vcmp.lt.s32.totalorder %v36, 3
    %vm58 = vcmp.lt.s32.totalorder %v36, 4
    %v59 = vsel %vm55, %v39, %v42
    %v60 = vsel %vm58, %v48, 2102212464
    %v61 = vsel %vm57, %v45, %v60
    %v62 = vsel %vm56, %v59, %v61
    %v63 = vsel %vm55, %v42, %v45
    %v64 = vsel %vm58, %v51, 920167782
    %v65 = vsel %vm57, %v48, %v64
    %v66 = vsel %vm56, %v63, %v65
    %v67 = vsel %vm55, %v45, %v48
    %v68 = vsel %vm58, %v54, 1326507024
    %v69 = vsel %vm57, %v51, %v68
    %v70 = vsel %vm56, %v67, %v69
    %v71 = vshll.u32 %v31, 8
    %v72 = vmul.u32.u64.compose %v71, %v70
    %v73 = vextract.low.u32 %v72
    %v74 = vextract.high.u32 %v72
    %v75 = vmul.u32.u64.compose %v71, %v66
    %v76 = vextract.low.u32 %v75
    %v77 = vextract.high.u32 %v75
    %v78 = vmul.u32 %v71, %v62
    %v79 = vadd.s32 %v74, %v76
    %vm80 = vc.u32 %v74, %v76
    %v81 = vadd.s32 %v77, 1
    %v82 = vsel %vm80, %v81, %v77
    %v83 = vadd.s32 %v78, %v82
    %v84 = vadd.s32 %v83, 536870912
    %v85 = vshrl.u32 %v84, 30
    %v86 = vshll.u32 %v85, 30
    %v87 = vsub.s32 %v83, %v86
    %vm88 = vcmp.lt.s32.totalorder %v87, 0
    %v89 = vsub.s32 0, %v87
    %v90 = vsel %vm88, %v89, %v87
    %v91 = vclz %v90
    %v92 = vsub.s32 %v91, 2
    %vm93 = vcmp.gt.s32.totalorder 0, %v92
    %v94 = vsel %vm93, 0, %v92
    %v95 = vsub.s32 32, %v94
    %v96 = vshll.u32 %v87, %v94
    %v97 = vshrl.u32 %v79, %v95
    %v98 = vor.u32 %v96, %v97
    %v99 = vsub.s32 4294967266, %v94
    %v100 = vadd.s32 %v99, 127
    %v101 = vshll.u32 %v100, 23
    %v102 = vor.u32 4788187, %v101
    %v103 = vand.u32 2147483647, %v102
    %v105 = vcvt.s32.f32 %v98
    %v106 = vmul.f32 %v105, %v103
    %v107 = vxor.u32 %v106, 2147483648
    %v108 = vsel %vm25, %v107, %v106
    %v109 = vsub.s32 4, %v85
    %v110 = vsel %vm25, %v109, %v85
    %v111 = vsel %vm24, %v22, %v108
    %v112 = vsel %vm24, 0, %v110
    %v113 = vcosq.f32.pop %v111
    %v114 = vsinq.f32.pop %v111
    %vm115 = vweird.f32 %v22
    %v116 = vadd.s32 %v112, 3
    %v117 = vand.u32 %v116, 3
    %vm118 = vcmp.lt.s32.totalorder %v117, 2
    %vm119 = vcmp.eq.s32.totalorder %v117, 0
    %v120 = vxor.u32 %v114, 2147483648
    %v121 = vsel %vm119, %v113, %v120
    %vm122 = vcmp.eq.s32.totalorder %v117, 2
    %v123 = vxor.u32 %v113, 2147483648
    %v124 = vsel %vm122, %v123, %v114
    %v125 = vsel %vm118, %v121, %v124
    %v126 = vsel %vm115, nan, %v125
    %v127 = vld [vmem:[%s2] sm:$0xff]
    %v128 = vmul.f32 %v126, %v126
    %130 = vset.pattern.permute.xlu0 0
    %131 = vperm.xlu0 %130, %v127
    %v132 = vpop.permute.xlu0 %131
    %v134 = vmul.f32 %v132, %v128
    %v135 = vadd.f32 %v15, %v134
    %vm136 = vcmask 130048
    %137 = vst.msk [vmem:[#allocation2] sm:$0xff] %vm136, %v135
    // Predicated region
    $region14: #{snake_beta.1} parent=1 // pred_check
      _
    $region15: #{snake_beta.1} parent=1 // pred_check_branch
      %139 = sbr.rel (0) target = $region17
    $region16: #{snake_beta.1} parent=1 // pred_region
      %s141 = ssub.s32 128, 128
      %142 = vsyncadd [#allocation3], %s141
      %s144 = sshll.u32 [#allocation2], 4
      %s145 = int_to_ptr.vmem [resolvable:$true] %s144
      %147 = dma.vmem_to_hbm [thread:$0]  %s145, 128, %s3, [#allocation3]
    $region17: #{snake_beta.1} parent=1 // pred_fallthru
      _
    // Predicated region
    $region18: #{snake_beta.1} parent=1 // pred_check
      _
    $region19: #{snake_beta.1} parent=1 // pred_check_branch
      %149 = sbr.rel (0) target = $region21
    $region20: #{snake_beta.1} parent=1 // pred_region
      %150 = dma.done [#allocation3], 128
    $region21: #{snake_beta.1} parent=1 // pred_fallthru
      _
    %151 = vsyncpa [#allocation3], 1

</llo_original>
